<compile_context>
chip_gen: v6e
topology: v6e:2x2x1
jax: 0.10.0
libtpu: 0.0.40
codegen_flags: <defaults>
</compile_context>

<pallas_src>
import functools

import numpy as np
import jax
import jax.numpy as jnp
from jax.experimental import pallas as pl
from jax.experimental.pallas import tpu as pltpu


# ----------------------------------------------------------------------------
# Deterministic parameter construction (pure numpy "glue", runs at trace time)
# ----------------------------------------------------------------------------
def chebwin(M, at):
    """Dolph-Chebyshev window (same algorithm as scipy.signal.windows.chebwin)."""
    if M == 1:
        return np.ones(1, dtype=np.float64)
    order = M - 1.0
    beta = np.cosh(1.0 / order * np.arccosh(10 ** (abs(at) / 20.0)))
    k = np.arange(M, dtype=np.float64)
    x = beta * np.cos(np.pi * k / M)
    p = np.zeros_like(x)
    gt, lt, mid = x > 1, x < -1, np.abs(x) <= 1
    p[gt] = np.cosh(order * np.arccosh(x[gt]))
    p[lt] = (2 * (M % 2) - 1) * np.cosh(order * np.arccosh(-x[lt]))
    p[mid] = np.cos(order * np.arccos(x[mid]))
    if M % 2:
        w = np.real(np.fft.fft(p))
        n = (M + 1) // 2
        w = w[:n]
        w = np.concatenate((w[n - 1:0:-1], w))
    else:
        p = p * np.exp(1j * np.pi / M * np.arange(M))
        w = np.real(np.fft.fft(p))
        n = M // 2 + 1
        w = np.concatenate((w[n - 1:0:-1], w[1:n]))
    return w / np.max(w)


def windowed_dft_matrix(K, N, window, shift):
    """Complex DFT matrix (K input points -> N bins), window folded on rows,
    optional fftshift folded on output columns."""
    k = np.arange(K)[:, None]
    n = np.arange(N)[None, :]
    if shift:
        n = (n + N // 2) % N
    return np.exp(-2j * np.pi * k * n / N) * window[:, None]   # (K, N) complex128


def tdm_phase(tx, doppler_bin):
    """TDM-MIMO doppler phase compensation, per (tx index, fftshifted doppler bin)."""
    t_idx = np.arange(tx)[:, None]
    d_idx = np.arange(doppler_bin)[None, :] - doppler_bin // 2
    return np.exp(-2j * np.pi * t_idx * d_idx / (tx * doppler_bin))   # (T, D)


def build_params(raw_shape, fft_shape):
    tx, rx, chirps, samples = raw_shape
    angle_bin, doppler_bin, range_bin = fft_shape
    ant = tx * rx

    w_rng = windowed_dft_matrix(samples, range_bin, chebwin(samples, 80), shift=False)
    w_dop = windowed_dft_matrix(chirps, doppler_bin, chebwin(chirps, 60), shift=True)
    w_ang = windowed_dft_matrix(ant, angle_bin, chebwin(ant, 50), shift=True)
    phase = tdm_phase(tx, doppler_bin)                          # (T, D)

    # Fold phase compensation into a per-virtual-antenna doppler DFT matrix.
    w_dop_ant = w_dop[None, :, :] * phase[:, None, :]           # (T, C, D)
    w_dop_ant = np.repeat(w_dop_ant, rx, axis=0)                # (ANT, C, D), ant = t*rx + r

    # Combined (Doppler+phase) x Angle operator, applied from the right:
    #   bcomb[(ant, c), (a, d)] = w_dop_ant[ant, c, d] * w_ang[ant, a]
    bcomb = np.einsum('vcd,va->vcad', w_dop_ant, w_ang)         # (ANT, C, A, D)
    bcomb = bcomb.reshape(ant * chirps, angle_bin * doppler_bin)

    # Real-stacked complex-matmul operators.
    # Right multiply  Y = X @ W :  [Xr | Xi] @ [[Wr, Wi], [-Wi, Wr]] = [Yr | Yi]
    w_comb_right = np.block([[bcomb.real,  bcomb.imag],
                             [-bcomb.imag, bcomb.real]]).astype(np.float32)   # (2*ANT*C, 2*A*D)
    # Left multiply   Y = W^T @ X : [[Wr^T, -Wi^T], [Wi^T, Wr^T]] @ [Xr; Xi] = [Yr; Yi]
    w_range_left = np.block([[w_rng.real.T, -w_rng.imag.T],
                             [w_rng.imag.T,  w_rng.real.T]]).astype(np.float32)  # (2*RNG, 2*S)

    return dict(w_range_left=jnp.asarray(w_range_left),
                w_comb_right=jnp.asarray(w_comb_right))


# ----------------------------------------------------------------------------
# Fused Pallas kernel: whole pipeline per batch element, all VMEM-resident
# ----------------------------------------------------------------------------
def _radar_fused_kernel(xt_r_ref, xt_i_ref, w_rng_ref, w_comb_ref, out_ref):
    # xt_*_ref : (1, S, ANT*C)     per-batch input, sample-major / antenna-chirp lanes
    # w_rng_ref: (2*RNG, 2*S)      left-stacked range DFT
    # w_comb_ref:(2*ANT*C, 2*A*D)  right-stacked combined doppler(+phase) x angle DFT
    # out_ref  : (1, 2*RNG, A*D)   rows [0:RNG)=real, [RNG:2*RNG)=imag; lanes (angle, doppler)
    xr = xt_r_ref[0]                                   # (S, ANT*C)
    xi = xt_i_ref[0]

    # conj(x), right-stacked along lanes: [Re | -Im] -> (S, 2*ANT*C)
    g_in = jnp.concatenate([xr, -xi], axis=-1)

    # Combined Doppler(+TDM phase) x Angle DFT (contracts the (ant, chirp) axis).
    g = jnp.dot(g_in, w_comb_ref[...],
                preferred_element_type=jnp.float32)    # (S, 2*A*D)

    # Re-stack complex along rows: [Gr; Gi] -> (2*S, A*D).
    n = g.shape[-1] // 2
    g_cs = jnp.concatenate([g[:, :n], g[:, n:]], axis=0)

    # Range DFT applied from the left (contracts the sample axis).
    out_ref[0] = jnp.dot(w_rng_ref[...], g_cs,
                         preferred_element_type=jnp.float32)   # (2*RNG, A*D)


def radar_fft3d(xr, xi, w_range_left, w_comb_right, *, fft_shape):
    """(B, tx, rx, chirps, samples) real/imag -> (B, angle, doppler, range) real/imag."""
    angle_bin, doppler_bin, range_bin = fft_shape
    B, T, R, C, S = xr.shape
    ANT = T * R
    AD = angle_bin * doppler_bin

    # One-time layout plumbing (tiny, outside the kernel): the kernel wants the
    # per-batch data as (S, ANT*C) with ant = t*R + r major, chirp minor.
    xt_r = jnp.transpose(xr, (0, 4, 1, 2, 3)).reshape(B, S, ANT * C)
    xt_i = jnp.transpose(xi, (0, 4, 1, 2, 3)).reshape(B, S, ANT * C)

    out = pl.pallas_call(
        _radar_fused_kernel,
        out_shape=jax.ShapeDtypeStruct((B, 2 * range_bin, AD), jnp.float32),
        grid=(B,),
        in_specs=[
            pl.BlockSpec((1, S, ANT * C), lambda b: (b, 0, 0)),
            pl.BlockSpec((1, S, ANT * C), lambda b: (b, 0, 0)),
            pl.BlockSpec((2 * range_bin, 2 * S), lambda b: (0, 0)),
            pl.BlockSpec((2 * ANT * C, 2 * AD), lambda b: (0, 0)),
        ],
        out_specs=pl.BlockSpec((1, 2 * range_bin, AD), lambda b: (b, 0, 0)),
        compiler_params=pltpu.CompilerParams(dimension_semantics=("parallel",)),
    )(xt_r, xt_i, w_range_left, w_comb_right)

    # Unpack the lane-dense kernel output: rows=real/imag, lanes=(angle, doppler).
    out_r = out[:, :range_bin, :].reshape(B, range_bin, angle_bin, doppler_bin)
    out_i = out[:, range_bin:, :].reshape(B, range_bin, angle_bin, doppler_bin)
    out_r = jnp.transpose(out_r, (0, 2, 3, 1))   # (B, angle, doppler, range)
    out_i = jnp.transpose(out_i, (0, 2, 3, 1))
    return out_r, out_i


# ----------------------------------------------------------------------------
# Pure-numpy stage-by-stage reference (independent of the fused operator math)
# ----------------------------------------------------------------------------
def reference_pipeline(x, raw_shape, fft_shape):
    tx, rx, chirps, samples = raw_shape
    angle_bin, doppler_bin, range_bin = fft_shape
    B = x.shape[0]
    x = np.conj(np.asarray(x, dtype=np.complex128))
    w_rng = windowed_dft_matrix(samples, range_bin, chebwin(samples, 80), shift=False)
    w_dop = windowed_dft_matrix(chirps, doppler_bin, chebwin(chirps, 60), shift=True)
    w_ang = windowed_dft_matrix(tx * rx, angle_bin, chebwin(tx * rx, 50), shift=True)
    phase = tdm_phase(tx, doppler_bin)
    y = np.einsum('btrcs,sk->btrck', x, w_rng)            # RangeFFT
    y = np.einsum('btrck,cd->btrdk', y, w_dop)            # DopplerFFT (+fftshift)
    y = y * phase[None, :, None, :, None]                 # PhaseCompensation
    y = y.reshape(B, tx * rx, doppler_bin, range_bin)     # 'b t r c s -> b (t r) c s'
    y = np.einsum('bvdk,va->badk', y, w_ang)              # AngleFFT (+fftshift, zero-pad)
    return y                                              # (B, angle, doppler, range)


# ----------------------------------------------------------------------------
if __name__ == "__main__":
    raw_shape = (2, 4, 16, 16)   # (tx, rx, chirps, samples)
    fft_shape = (16, 16, 16)     # (angle, doppler, range)
    batch = 2

    params = build_params(raw_shape, fft_shape)

    key = jax.random.PRNGKey(0)
    k1, k2 = jax.random.split(key)
    x_shape = (batch,) + raw_shape          # (B, tx, rx, chirps, samples)
    xr = jax.random.normal(k1, x_shape, dtype=jnp.float32)
    xi = jax.random.normal(k2, x_shape, dtype=jnp.float32)

    run = jax.jit(functools.partial(radar_fft3d, fft_shape=fft_shape))
    out_r, out_i = run(xr, xi, params["w_range_left"], params["w_comb_right"])
    jax.block_until_ready((out_r, out_i))

    out = np.asarray(out_r) + 1j * np.asarray(out_i)      # (B, angle, doppler, range)
    assert out.shape == (batch,) + fft_shape

    ref = reference_pipeline(np.asarray(xr) + 1j * np.asarray(xi), raw_shape, fft_shape)
    rel_err = np.max(np.abs(out - ref)) / np.max(np.abs(ref))
    assert rel_err < 2e-2, f"numerical mismatch vs reference: rel_err={rel_err}"

    print("KERNEL_OK")
</pallas_src>

<mosaic_0001>
module attributes {stable_mosaic.version = 11 : i64} {
  func.func @_radar_fused_kernel(%arg0: i32, %arg1: memref<1x16x128xf32, #tpu.memory_space<vmem>>, %arg2: memref<1x16x128xf32, #tpu.memory_space<vmem>>, %arg3: memref<32x32xf32, #tpu.memory_space<vmem>>, %arg4: memref<256x512xf32, #tpu.memory_space<vmem>>, %arg5: memref<1x32x256xf32, #tpu.memory_space<vmem>>) attributes {dimension_semantics = [#tpu.dimension_semantics<parallel>], iteration_bounds = array<i64: 2>, scalar_prefetch = 0 : i64, scratch_operands = 0 : i64, tpu.core_type = #tpu.core_type<tc>, window_params = [{transform_indices = @transform_0, window_bounds = array<i64: 1, 16, 128>}, {transform_indices = @transform_1, window_bounds = array<i64: 1, 16, 128>}, {pipeline_mode = #tpu.pipeline_mode<synchronous>, transform_indices = @transform_2, window_bounds = array<i64: 32, 32>}, {pipeline_mode = #tpu.pipeline_mode<synchronous>, transform_indices = @transform_3, window_bounds = array<i64: 256, 512>}, {transform_indices = @transform_4, window_bounds = array<i64: 1, 32, 256>}]} {
    %c0 = arith.constant 0 : index
    %c0_0 = arith.constant 0 : index
    %c0_1 = arith.constant 0 : index
    %0 = vector.load %arg1[%c0, %c0_0, %c0_1] : memref<1x16x128xf32, #tpu.memory_space<vmem>>, vector<1x16x128xf32>
    %1 = vector.shape_cast %0 : vector<1x16x128xf32> to vector<16x128xf32>
    %c0_2 = arith.constant 0 : index
    %c0_3 = arith.constant 0 : index
    %c0_4 = arith.constant 0 : index
    %2 = vector.load %arg2[%c0_2, %c0_3, %c0_4] : memref<1x16x128xf32, #tpu.memory_space<vmem>>, vector<1x16x128xf32>
    %3 = vector.shape_cast %2 : vector<1x16x128xf32> to vector<16x128xf32>
    %cst = arith.constant 0.000000e+00 : f32
    %4 = vector.broadcast %cst : f32 to vector<16x128xf32>
    %5 = arith.subf %4, %3 : vector<16x128xf32>
    %6 = tpu.concatenate %1, %5 in 1 : vector<16x128xf32>, vector<16x128xf32> -> vector<16x256xf32>
    %c0_5 = arith.constant 0 : index
    %c0_6 = arith.constant 0 : index
    %7 = vector.load %arg4[%c0_5, %c0_6] : memref<256x512xf32, #tpu.memory_space<vmem>>, vector<256x512xf32>
    %cst_7 = arith.constant dense<0.000000e+00> : vector<16x512xf32>
    %8 = tpu.matmul %6, %7, %cst_7 {dimension_numbers = #tpu.dot_dimension_numbers<[1], [0], [0], [1], [0, 0, 1, 1], [], []>} : vector<16x256xf32>, vector<256x512xf32>, vector<16x512xf32> -> vector<16x512xf32>
    %9 = vector.extract_strided_slice %8 {offsets = [0, 0], sizes = [16, 256], strides = [1, 1]} : vector<16x512xf32> to vector<16x256xf32>
    %10 = vector.extract_strided_slice %8 {offsets = [0, 256], sizes = [16, 256], strides = [1, 1]} : vector<16x512xf32> to vector<16x256xf32>
    %11 = tpu.concatenate %9, %10 in 0 : vector<16x256xf32>, vector<16x256xf32> -> vector<32x256xf32>
    %c0_8 = arith.constant 0 : index
    %c0_9 = arith.constant 0 : index
    %12 = vector.load %arg3[%c0_8, %c0_9] : memref<32x32xf32, #tpu.memory_space<vmem>>, vector<32x32xf32>
    %cst_10 = arith.constant dense<0.000000e+00> : vector<32x256xf32>
    %13 = tpu.matmul %12, %11, %cst_10 {dimension_numbers = #tpu.dot_dimension_numbers<[1], [0], [0], [1], [0, 0, 1, 1], [], []>} : vector<32x32xf32>, vector<32x256xf32>, vector<32x256xf32> -> vector<32x256xf32>
    %c0_11 = arith.constant 0 : index
    %c0_12 = arith.constant 0 : index
    %c0_13 = arith.constant 0 : index
    %14 = vector.load %arg5[%c0_11, %c0_12, %c0_13] : memref<1x32x256xf32, #tpu.memory_space<vmem>>, vector<1x32x256xf32>
    %15 = vector.shape_cast %14 : vector<1x32x256xf32> to vector<32x256xf32>
    %16 = vector.shape_cast %13 : vector<32x256xf32> to vector<1x32x256xf32>
    tpu.vector_store %arg5[%c0_11, %c0_12, %c0_13], %16 {strides = array<i32>} : memref<1x32x256xf32, #tpu.memory_space<vmem>>, vector<1x32x256xf32>,
    return
  }
  func.func @transform_0(%arg0: i32) -> (i32, i32, i32) {
    %c0_i32 = arith.constant 0 : i32
    %c0_i32_0 = arith.constant 0 : i32
    %c0_i32_1 = arith.constant 0 : i32
    return %arg0, %c0_i32, %c0_i32_0 : i32, i32, i32
  }
  func.func @transform_1(%arg0: i32) -> (i32, i32, i32) {
    %c0_i32 = arith.constant 0 : i32
    %c0_i32_0 = arith.constant 0 : i32
    %c0_i32_1 = arith.constant 0 : i32
    return %arg0, %c0_i32, %c0_i32_0 : i32, i32, i32
  }
  func.func @transform_2(%arg0: i32) -> (i32, i32) {
    %c0_i32 = arith.constant 0 : i32
    %c0_i32_0 = arith.constant 0 : i32
    %c0_i32_1 = arith.constant 0 : i32
    return %c0_i32, %c0_i32_0 : i32, i32
  }
  func.func @transform_3(%arg0: i32) -> (i32, i32) {
    %c0_i32 = arith.constant 0 : i32
    %c0_i32_0 = arith.constant 0 : i32
    %c0_i32_1 = arith.constant 0 : i32
    return %c0_i32, %c0_i32_0 : i32, i32
  }
  func.func @transform_4(%arg0: i32) -> (i32, i32, i32) {
    %c0_i32 = arith.constant 0 : i32
    %c0_i32_0 = arith.constant 0 : i32
    %c0_i32_1 = arith.constant 0 : i32
    return %arg0, %c0_i32, %c0_i32_0 : i32, i32, i32
  }
}

</mosaic_0001>

<llo_original>
// kernel: radar_fft3d.1
$region0: #{radar_fft3d.1}
  #allocation0 [shape = 'u32[]', space=smem, size = 0x4, offset = 0x4, fixed_abs, tag = 'smem constant byte address 0x4 - core index']
  #allocation1 [shape = 'u32[144,128]{1,0:T(1,128)}', space=vmem, size = 0x12000, scoped, tag = 'internal scratch']
  %s0 = inlined_call_operand.vmem [shape: f32[2,16,128], index: 0, kind: input, shape index: {}]
  %s1 = inlined_call_operand.vmem [shape: f32[2,16,128], index: 1, kind: input, shape index: {}]
  %s2 = inlined_call_operand.vmem [shape: f32[32,32], index: 2, kind: input, shape index: {}]
  %s3 = inlined_call_operand.hbm [shape: f32[256,512], index: 3, kind: input, shape index: {}]
  %s4 = inlined_call_operand.vmem [shape: f32[2,32,256], index: 4, kind: output, shape index: {}]
  %s5 = sld [smem:[#allocation0]]
  $region53: #{radar_fft3d.1} parent=0
    _
  %s7 = ssub.s32 1, %s5
  %s8 = scalar_select 0, %s7, %s5
  $region1: #{radar_fft3d.1} parent=0
    #allocation2 [shape = 'u8[524288]{0}', space=vmem, size = 0x80000, scoped, tag = 'input window, operand 3, single buffered']
    #allocation3 [shape = 's32[2]{0}', space=sflag, size = 0x8, scoped, tag = 'scoped memory for radar_fft3d.1']
    %9 = vsyncpa [#allocation3], 0
    loop: start=0, step=1, limit=4
    $region2: #{radar_fft3d.1} parent=1 // loop_pre_header
      _
    $region3: #{radar_fft3d.1} parent=1 // loop_header
      %s11 = sphi 0, %s15
      %p12 = scmp.ge.s32.totalorder %s11, 4
      %s21 = sphi 0, %s23
      %s24 = sphi 0, %s21
      %s25 = sphi 0, %s24
      %s41 = sphi 0, %s25
      %s47 = sphi 0, %s49
      %s50 = sphi 0, %s47
      %s51 = sphi 0, %s50
      %s67 = sphi 0, %s51
      %s71 = sphi 0, %s71
      %s73 = sphi 0, %s71
      %s74 = sphi 0, %s73
      %s88 = sphi 0, %s74
      %s92 = sphi 0, %s92
      %s94 = sphi 0, %s92
      %s95 = sphi 0, %s94
      %s109 = sphi 0, %s95
      %s115 = sphi 0, %s117
      %s118 = sphi 0, %s115
      %s119 = sphi 0, %s118
      %s135 = sphi 0, %s119
    $region4: #{radar_fft3d.1} parent=1 // loop_header_branch
      %14 = sbr.rel (%p12) target = $region8
    $region5: #{radar_fft3d.1} parent=1 // loop_body
      %s16 = ssub.s32 %s11, 1
      %s17 = ssub.s32 %s11, 2
      %s18 = sadd.s32 %s11, 1
      %s19 = ssub.s32 %s11, %s18
      %p20 = scmp.eq.s32.totalorder %s19, 0
      %s22 = sadd.s32 %s21, 1
      %s23 = scalar_select %p20, %s21, %s22
      %p26 = pneg %p20
      %p27 = scmp.eq.s32.totalorder %s11, 1
      %p28 = por %p26, %p27
      %p29 = scmp.ne.s32.totalorder %s21, %s24
      %p30 = scmp.eq.s32.totalorder %s11, 0
      %p31 = por %p29, %p30
      %p32 = scmp.ne.s32.totalorder %s21, %s24
      %p33 = scmp.eq.s32.totalorder %s16, 1
      %p34 = por %p32, %p33
      %p35 = scmp.ne.s32.totalorder %s24, %s25
      %p36 = scmp.eq.s32.totalorder %s16, 0
      %p37 = por %p35, %p36
      %p38 = scmp.ne.s32.totalorder %s24, %s25
      %p39 = scmp.eq.s32.totalorder %s17, 1
      %p40 = por %p38, %p39
      %p42 = scmp.ne.s32.totalorder %s25, %s41
      %p43 = scmp.eq.s32.totalorder %s17, 0
      %p44 = por %p42, %p43
      %s45 = ssub.s32 %s11, %s18
      %p46 = scmp.eq.s32.totalorder %s45, 0
      %s48 = sadd.s32 %s47, 1
      %s49 = scalar_select %p46, %s47, %s48
      %p52 = pneg %p46
      %p53 = scmp.eq.s32.totalorder %s11, 1
      %p54 = por %p52, %p53
      %p55 = scmp.ne.s32.totalorder %s47, %s50
      %p56 = scmp.eq.s32.totalorder %s11, 0
      %p57 = por %p55, %p56
      %p58 = scmp.ne.s32.totalorder %s47, %s50
      %p59 = scmp.eq.s32.totalorder %s16, 1
      %p60 = por %p58, %p59
      %p61 = scmp.ne.s32.totalorder %s50, %s51
      %p62 = scmp.eq.s32.totalorder %s16, 0
      %p63 = por %p61, %p62
      %p64 = scmp.ne.s32.totalorder %s50, %s51
      %p65 = scmp.eq.s32.totalorder %s17, 1
      %p66 = por %p64, %p65
      %p68 = scmp.ne.s32.totalorder %s51, %s67
      %p69 = scmp.eq.s32.totalorder %s17, 0
      %p70 = por %p68, %p69
      %s72 = sadd.s32 %s71, 1
      %p75 = scmp.eq.s32.totalorder %s11, 1
      %p76 = scmp.ne.s32.totalorder %s71, %s73
      %p77 = scmp.eq.s32.totalorder %s11, 0
      %p78 = por %p76, %p77
      %p79 = scmp.ne.s32.totalorder %s71, %s73
      %p80 = scmp.eq.s32.totalorder %s16, 1
      %p81 = por %p79, %p80
      %p82 = scmp.ne.s32.totalorder %s73, %s74
      %p83 = scmp.eq.s32.totalorder %s16, 0
      %p84 = por %p82, %p83
      %p85 = scmp.ne.s32.totalorder %s73, %s74
      %p86 = scmp.eq.s32.totalorder %s17, 1
      %p87 = por %p85, %p86
      %p89 = scmp.ne.s32.totalorder %s74, %s88
      %p90 = scmp.eq.s32.totalorder %s17, 0
      %p91 = por %p89, %p90
      %s93 = sadd.s32 %s92, 1
      %p96 = scmp.eq.s32.totalorder %s11, 1
      %p97 = scmp.ne.s32.totalorder %s92, %s94
      %p98 = scmp.eq.s32.totalorder %s11, 0
      %p99 = por %p97, %p98
      %p100 = scmp.ne.s32.totalorder %s92, %s94
      %p101 = scmp.eq.s32.totalorder %s16, 1
      %p102 = por %p100, %p101
      %p103 = scmp.ne.s32.totalorder %s94, %s95
      %p104 = scmp.eq.s32.totalorder %s16, 0
      %p105 = por %p103, %p104
      %p106 = scmp.ne.s32.totalorder %s94, %s95
      %p107 = scmp.eq.s32.totalorder %s17, 1
      %p108 = por %p106, %p107
      %p110 = scmp.ne.s32.totalorder %s95, %s109
      %p111 = scmp.eq.s32.totalorder %s17, 0
      %p112 = por %p110, %p111
      %s113 = ssub.s32 %s11, %s18
      %p114 = scmp.eq.s32.totalorder %s113, 0
      %s116 = sadd.s32 %s115, 1
      %s117 = scalar_select %p114, %s115, %s116
      %p120 = pneg %p114
      %p121 = scmp.eq.s32.totalorder %s11, 1
      %p122 = por %p120, %p121
      %p123 = scmp.ne.s32.totalorder %s115, %s118
      %p124 = scmp.eq.s32.totalorder %s11, 0
      %p125 = por %p123, %p124
      %p126 = scmp.ne.s32.totalorder %s115, %s118
      %p127 = scmp.eq.s32.totalorder %s16, 1
      %p128 = por %p126, %p127
      %p129 = scmp.ne.s32.totalorder %s118, %s119
      %p130 = scmp.eq.s32.totalorder %s16, 0
      %p131 = por %p129, %p130
      %p132 = scmp.ne.s32.totalorder %s118, %s119
      %p133 = scmp.eq.s32.totalorder %s17, 1
      %p134 = por %p132, %p133
      %p136 = scmp.ne.s32.totalorder %s119, %s135
      %p137 = scmp.eq.s32.totalorder %s17, 0
      %p138 = por %p136, %p137
      %p139 = scmp.le.s32.totalorder 1, %s11
      %p140 = scmp.lt.s32.totalorder %s11, 3
      %p141 = pnand %p139, %p140
      %p142 = pneg %p141
      // Predicated region
      $region9: #{radar_fft3d.1} parent=5 // pred_check
        _
      $region10: #{radar_fft3d.1} parent=5 // pred_check_branch
        %144 = sbr.rel (%p141) target = $region12
      $region11: #{radar_fft3d.1} parent=5 // pred_region
        %s145 = ssub.s32 %s11, 1
        // Predicated region
        $region13: #{radar_fft3d.1} parent=11 // pred_check
          %p146 = pneg %p84
        $region14: #{radar_fft3d.1} parent=11 // pred_check_branch
          %148 = sbr.rel (%p146) target = $region16
        $region15: #{radar_fft3d.1} parent=11 // pred_region
          _
        $region16: #{radar_fft3d.1} parent=11 // pred_fallthru
          _
        // Predicated region
        $region17: #{radar_fft3d.1} parent=11 // pred_check
          %p149 = pneg %p105
        $region18: #{radar_fft3d.1} parent=11 // pred_check_branch
          %151 = sbr.rel (%p149) target = $region20
        $region19: #{radar_fft3d.1} parent=11 // pred_region
          %s153 = ssub.s32 16384, 16384
          %154 = vsyncadd [#allocation3], %s153
          %s155 = sshll.u32 [#allocation2], 4
          %s156 = int_to_ptr.vmem [resolvable:$true] %s155
          %161 = dma.hbm_to_vmem [thread:$0]  %s3, 16384, %s156, [#allocation3], 512, 512, 32
        $region20: #{radar_fft3d.1} parent=11 // pred_fallthru
          _
      $region12: #{radar_fft3d.1} parent=5 // pred_fallthru
        _
      %p162 = scmp.lt.s32.totalorder %s11, 2
      // Predicated region
      $region21: #{radar_fft3d.1} parent=5 // pred_check
        %p163 = pneg %p162
      $region22: #{radar_fft3d.1} parent=5 // pred_check_branch
        %165 = sbr.rel (%p163) target = $region24
      $region23: #{radar_fft3d.1} parent=5 // pred_region
        // Predicated region
        $region25: #{radar_fft3d.1} parent=23 // pred_check
          %p166 = pneg %p31
        $region26: #{radar_fft3d.1} parent=23 // pred_check_branch
          %168 = sbr.rel (%p166) target = $region28
        $region27: #{radar_fft3d.1} parent=23 // pred_region
          %p169 = scmp.lt.s32.totalorder %s11, 1
          %s170 = scalar_select %p169, %s11, 1
          %s171 = smul.addr %s170, 2
          %s172 = smul.addr %s171, 8
          %s173 = scalar_lea.vmem %s0, %s172
        $region28: #{radar_fft3d.1} parent=23 // pred_fallthru
          _
        // Predicated region
        $region29: #{radar_fft3d.1} parent=23 // pred_check
          %p174 = pneg %p57
        $region30: #{radar_fft3d.1} parent=23 // pred_check_branch
          %176 = sbr.rel (%p174) target = $region32
        $region31: #{radar_fft3d.1} parent=23 // pred_region
          %p177 = scmp.lt.s32.totalorder %s11, 1
          %s178 = scalar_select %p177, %s11, 1
          %s179 = smul.addr %s178, 2
          %s180 = smul.addr %s179, 8
          %s181 = scalar_lea.vmem %s1, %s180
        $region32: #{radar_fft3d.1} parent=23 // pred_fallthru
          _
      $region24: #{radar_fft3d.1} parent=5 // pred_fallthru
        _
      %p182 = scmp.le.s32.totalorder 1, %s11
      %p183 = scmp.lt.s32.totalorder %s11, 3
      %p184 = pnand %p182, %p183
      %p185 = pneg %p184
      // Predicated region
      $region33: #{radar_fft3d.1} parent=5 // pred_check
        _
      $region34: #{radar_fft3d.1} parent=5 // pred_check_branch
        %187 = sbr.rel (%p184) target = $region36
      $region35: #{radar_fft3d.1} parent=5 // pred_region
        %s188 = ssub.s32 %s11, 1
        // Predicated region
        $region37: #{radar_fft3d.1} parent=35 // pred_check
          %p189 = pneg %p105
        $region38: #{radar_fft3d.1} parent=35 // pred_check_branch
          %191 = sbr.rel (%p189) target = $region40
        $region39: #{radar_fft3d.1} parent=35 // pred_region
          %192 = dma.done [#allocation3], 16384
        $region40: #{radar_fft3d.1} parent=35 // pred_fallthru
          _
        %p193 = scmp.lt.s32.totalorder %s16, 1
        %s194 = scalar_select %p193, %s16, 1
        %s195 = smul.addr %s194, 2
        %s196 = smul.addr %s195, 8
        %s197 = scalar_lea.vmem %s0, %s196
        %p198 = pneg %p37
        %p199 = pneg %p34
        %p200 = scmp.lt.s32.totalorder %s16, 1
        %s201 = scalar_select %p200, %s16, 1
        %s202 = smul.addr %s201, 2
        %s203 = smul.addr %s202, 8
        %s204 = scalar_lea.vmem %s1, %s203
        %p205 = pneg %p63
        %p206 = pneg %p60
        %p207 = pneg %p84
        %p208 = pneg %p81
        %p209 = pneg %p105
        %p210 = pneg %p102
        %p211 = pneg %p131
        %p212 = pneg %p128
        %p213 = scmp.lt.s32.totalorder %s16, 1
        %s214 = scalar_select %p213, %s16, 1
        %s215 = smul.addr %s214, 8
        %s216 = smul.addr %s215, 8
        %s217 = scalar_lea.vmem %s4, %s216
        %p218 = scmp.lt.s32.totalorder %s16, 1
        %s219 = scalar_select %p218, %s16, 1
        %s220 = smul.addr %s219, 2
        %s221 = smul.addr %s220, 8
        %s222 = scalar_lea.vmem %s0, %s221
        %p223 = scmp.lt.s32.totalorder %s16, 1
        %s224 = scalar_select %p223, %s16, 1
        %s225 = smul.addr %s224, 2
        %s226 = smul.addr %s225, 8
        %s227 = scalar_lea.vmem %s1, %s226
        %p228 = scmp.lt.s32.totalorder %s16, 1
        %s229 = scalar_select %p228, %s16, 1
        %s230 = smul.addr %s229, 8
        %s231 = smul.addr %s230, 8
        %s232 = scalar_lea.vmem %s4, %s231
        %v233 = vld [vmem:[%s222] sm:$0xff]
        %v234 = vld [vmem:[%s222 + $0x8] sm:$0xff]
        %v235 = vld [vmem:[%s227] sm:$0xff]
        %v236 = vld [vmem:[%s227 + $0x8] sm:$0xff]
        %v237 = vsub.f32 0.0, %v235
        %v238 = vsub.f32 0.0, %v236
        %v239 = vld [vmem:[#allocation2] sm:$0xff]
        %v240 = vld [vmem:[#allocation2 + $0x8] sm:$0xff]
        %v241 = vld [vmem:[#allocation2 + $0x10] sm:$0xff]
        %v242 = vld [vmem:[#allocation2 + $0x18] sm:$0xff]
        %v243 = vld [vmem:[#allocation2 + $0x20] sm:$0xff]
        %v244 = vld [vmem:[#allocation2 + $0x28] sm:$0xff]
        %v245 = vld [vmem:[#allocation2 + $0x30] sm:$0xff]
        %v246 = vld [vmem:[#allocation2 + $0x38] sm:$0xff]
        %v247 = vld [vmem:[#allocation2 + $0x40] sm:$0xff]
        %v248 = vld [vmem:[#allocation2 + $0x48] sm:$0xff]
        %v249 = vld [vmem:[#allocation2 + $0x50] sm:$0xff]
        %v250 = vld [vmem:[#allocation2 + $0x58] sm:$0xff]
        %v251 = vld [vmem:[#allocation2 + $0x60] sm:$0xff]
        %v252 = vld [vmem:[#allocation2 + $0x68] sm:$0xff]
        %v253 = vld [vmem:[#allocation2 + $0x70] sm:$0xff]
        %v254 = vld [vmem:[#allocation2 + $0x78] sm:$0xff]
        %v255 = vld [vmem:[#allocation2 + $0x80] sm:$0xff]
        %v256 = vld [vmem:[#allocation2 + $0x88] sm:$0xff]
        %v257 = vld [vmem:[#allocation2 + $0x90] sm:$0xff]
        %v258 = vld [vmem:[#allocation2 + $0x98] sm:$0xff]
        %v259 = vld [vmem:[#allocation2 + $0xa0] sm:$0xff]
        %v260 = vld [vmem:[#allocation2 + $0xa8] sm:$0xff]
        %v261 = vld [vmem:[#allocation2 + $0xb0] sm:$0xff]
        %v262 = vld [vmem:[#allocation2 + $0xb8] sm:$0xff]
        %v263 = vld [vmem:[#allocation2 + $0xc0] sm:$0xff]
        %v264 = vld [vmem:[#allocation2 + $0xc8] sm:$0xff]
        %v265 = vld [vmem:[#allocation2 + $0xd0] sm:$0xff]
        %v266 = vld [vmem:[#allocation2 + $0xd8] sm:$0xff]
        %v267 = vld [vmem:[#allocation2 + $0xe0] sm:$0xff]
        %v268 = vld [vmem:[#allocation2 + $0xe8] sm:$0xff]
        %v269 = vld [vmem:[#allocation2 + $0xf0] sm:$0xff]
        %v270 = vld [vmem:[#allocation2 + $0xf8] sm:$0xff]
        %v271 = vld [vmem:[#allocation2 + $0x100] sm:$0xff]
        %v272 = vld [vmem:[#allocation2 + $0x108] sm:$0xff]
        %v273 = vld [vmem:[#allocation2 + $0x110] sm:$0xff]
        %v274 = vld [vmem:[#allocation2 + $0x118] sm:$0xff]
        %v275 = vld [vmem:[#allocation2 + $0x120] sm:$0xff]
        %v276 = vld [vmem:[#allocation2 + $0x128] sm:$0xff]
        %v277 = vld [vmem:[#allocation2 + $0x130] sm:$0xff]
        %v278 = vld [vmem:[#allocation2 + $0x138] sm:$0xff]
        %v279 = vld [vmem:[#allocation2 + $0x140] sm:$0xff]
        %v280 = vld [vmem:[#allocation2 + $0x148] sm:$0xff]
        %v281 = vld [vmem:[#allocation2 + $0x150] sm:$0xff]
        %v282 = vld [vmem:[#allocation2 + $0x158] sm:$0xff]
        %v283 = vld [vmem:[#allocation2 + $0x160] sm:$0xff]
        %v284 = vld [vmem:[#allocation2 + $0x168] sm:$0xff]
        %v285 = vld [vmem:[#allocation2 + $0x170] sm:$0xff]
        %v286 = vld [vmem:[#allocation2 + $0x178] sm:$0xff]
        %v287 = vld [vmem:[#allocation2 + $0x180] sm:$0xff]
        %v288 = vld [vmem:[#allocation2 + $0x188] sm:$0xff]
        %v289 = vld [vmem:[#allocation2 + $0x190] sm:$0xff]
        %v290 = vld [vmem:[#allocation2 + $0x198] sm:$0xff]
        %v291 = vld [vmem:[#allocation2 + $0x1a0] sm:$0xff]
        %v292 = vld [vmem:[#allocation2 + $0x1a8] sm:$0xff]
        %v293 = vld [vmem:[#allocation2 + $0x1b0] sm:$0xff]
        %v294 = vld [vmem:[#allocation2 + $0x1b8] sm:$0xff]
        %v295 = vld [vmem:[#allocation2 + $0x1c0] sm:$0xff]
        %v296 = vld [vmem:[#allocation2 + $0x1c8] sm:$0xff]
        %v297 = vld [vmem:[#allocation2 + $0x1d0] sm:$0xff]
        %v298 = vld [vmem:[#allocation2 + $0x1d8] sm:$0xff]
        %v299 = vld [vmem:[#allocation2 + $0x1e0] sm:$0xff]
        %v300 = vld [vmem:[#allocation2 + $0x1e8] sm:$0xff]
        %v301 = vld [vmem:[#allocation2 + $0x1f0] sm:$0xff]
        %v302 = vld [vmem:[#allocation2 + $0x1f8] sm:$0xff]
        %v303 = vld [vmem:[#allocation2 + $0x200] sm:$0xff]
        %v304 = vld [vmem:[#allocation2 + $0x208] sm:$0xff]
        %v305 = vld [vmem:[#allocation2 + $0x210] sm:$0xff]
        %v306 = vld [vmem:[#allocation2 + $0x218] sm:$0xff]
        %v307 = vld [vmem:[#allocation2 + $0x220] sm:$0xff]
        %v308 = vld [vmem:[#allocation2 + $0x228] sm:$0xff]
        %v309 = vld [vmem:[#allocation2 + $0x230] sm:$0xff]
        %v310 = vld [vmem:[#allocation2 + $0x238] sm:$0xff]
        %v311 = vld [vmem:[#allocation2 + $0x240] sm:$0xff]
        %v312 = vld [vmem:[#allocation2 + $0x248] sm:$0xff]
        %v313 = vld [vmem:[#allocation2 + $0x250] sm:$0xff]
        %v314 = vld [vmem:[#allocation2 + $0x258] sm:$0xff]
        %v315 = vld [vmem:[#allocation2 + $0x260] sm:$0xff]
        %v316 = vld [vmem:[#allocation2 + $0x268] sm:$0xff]
        %v317 = vld [vmem:[#allocation2 + $0x270] sm:$0xff]
        %v318 = vld [vmem:[#allocation2 + $0x278] sm:$0xff]
        %v319 = vld [vmem:[#allocation2 + $0x280] sm:$0xff]
        %v320 = vld [vmem:[#allocation2 + $0x288] sm:$0xff]
        %v321 = vld [vmem:[#allocation2 + $0x290] sm:$0xff]
        %v322 = vld [vmem:[#allocation2 + $0x298] sm:$0xff]
        %v323 = vld [vmem:[#allocation2 + $0x2a0] sm:$0xff]
        %v324 = vld [vmem:[#allocation2 + $0x2a8] sm:$0xff]
        %v325 = vld [vmem:[#allocation2 + $0x2b0] sm:$0xff]
        %v326 = vld [vmem:[#allocation2 + $0x2b8] sm:$0xff]
        %v327 = vld [vmem:[#allocation2 + $0x2c0] sm:$0xff]
        %v328 = vld [vmem:[#allocation2 + $0x2c8] sm:$0xff]
        %v329 = vld [vmem:[#allocation2 + $0x2d0] sm:$0xff]
        %v330 = vld [vmem:[#allocation2 + $0x2d8] sm:$0xff]
        %v331 = vld [vmem:[#allocation2 + $0x2e0] sm:$0xff]
        %v332 = vld [vmem:[#allocation2 + $0x2e8] sm:$0xff]
        %v333 = vld [vmem:[#allocation2 + $0x2f0] sm:$0xff]
        %v334 = vld [vmem:[#allocation2 + $0x2f8] sm:$0xff]
        %v335 = vld [vmem:[#allocation2 + $0x300] sm:$0xff]
        %v336 = vld [vmem:[#allocation2 + $0x308] sm:$0xff]
        %v337 = vld [vmem:[#allocation2 + $0x310] sm:$0xff]
        %v338 = vld [vmem:[#allocation2 + $0x318] sm:$0xff]
        %v339 = vld [vmem:[#allocation2 + $0x320] sm:$0xff]
        %v340 = vld [vmem:[#allocation2 + $0x328] sm:$0xff]
        %v341 = vld [vmem:[#allocation2 + $0x330] sm:$0xff]
        %v342 = vld [vmem:[#allocation2 + $0x338] sm:$0xff]
        %v343 = vld [vmem:[#allocation2 + $0x340] sm:$0xff]
        %v344 = vld [vmem:[#allocation2 + $0x348] sm:$0xff]
        %v345 = vld [vmem:[#allocation2 + $0x350] sm:$0xff]
        %v346 = vld [vmem:[#allocation2 + $0x358] sm:$0xff]
        %v347 = vld [vmem:[#allocation2 + $0x360] sm:$0xff]
        %v348 = vld [vmem:[#allocation2 + $0x368] sm:$0xff]
        %v349 = vld [vmem:[#allocation2 + $0x370] sm:$0xff]
        %v350 = vld [vmem:[#allocation2 + $0x378] sm:$0xff]
        %v351 = vld [vmem:[#allocation2 + $0x380] sm:$0xff]
        %v352 = vld [vmem:[#allocation2 + $0x388] sm:$0xff]
        %v353 = vld [vmem:[#allocation2 + $0x390] sm:$0xff]
        %v354 = vld [vmem:[#allocation2 + $0x398] sm:$0xff]
        %v355 = vld [vmem:[#allocation2 + $0x3a0] sm:$0xff]
        %v356 = vld [vmem:[#allocation2 + $0x3a8] sm:$0xff]
        %v357 = vld [vmem:[#allocation2 + $0x3b0] sm:$0xff]
        %v358 = vld [vmem:[#allocation2 + $0x3b8] sm:$0xff]
        %v359 = vld [vmem:[#allocation2 + $0x3c0] sm:$0xff]
        %v360 = vld [vmem:[#allocation2 + $0x3c8] sm:$0xff]
        %v361 = vld [vmem:[#allocation2 + $0x3d0] sm:$0xff]
        %v362 = vld [vmem:[#allocation2 + $0x3d8] sm:$0xff]
        %v363 = vld [vmem:[#allocation2 + $0x3e0] sm:$0xff]
        %v364 = vld [vmem:[#allocation2 + $0x3e8] sm:$0xff]
        %v365 = vld [vmem:[#allocation2 + $0x3f0] sm:$0xff]
        %v366 = vld [vmem:[#allocation2 + $0x3f8] sm:$0xff]
        %367 = vmatprep.subr.mxu0 %v300
        %368 = vmatpush1.msra.mxu0 %v299
        %369 = vmatprep.subr.mxu0 %v296
        %370 = vmatpush1.msra.mxu0 %v295
        %371 = vmatprep.subr.mxu0 %v292
        %372 = vmatpush1.msra.mxu0 %v291
        %373 = vmatprep.subr.mxu0 %v288
        %374 = vmatpush1.msra.mxu0 %v287
        %375 = vmatprep.subr.mxu0 %v284
        %376 = vmatpush1.msra.mxu0 %v283
        %377 = vmatprep.subr.mxu0 %v280
        %378 = vmatpush1.msra.mxu0 %v279
        %379 = vmatprep.subr.mxu0 %v276
        %380 = vmatpush1.msra.mxu0 %v275
        %381 = vmatprep.subr.mxu0 %v272
        %382 = vmatpush1.msra.mxu0 %v271
        %383 = vmatprep.subr.mxu0 %v268
        %384 = vmatpush1.msra.mxu0 %v267
        %385 = vmatprep.subr.mxu0 %v264
        %386 = vmatpush1.msra.mxu0 %v263
        %387 = vmatprep.subr.mxu0 %v260
        %388 = vmatpush1.msra.mxu0 %v259
        %389 = vmatprep.subr.mxu0 %v256
        %390 = vmatpush1.msra.mxu0 %v255
        %391 = vmatprep.subr.mxu0 %v252
        %392 = vmatpush1.msra.mxu0 %v251
        %393 = vmatprep.subr.mxu0 %v248
        %394 = vmatpush1.msra.mxu0 %v247
        %395 = vmatprep.subr.mxu0 %v244
        %396 = vmatpush1.msra.mxu0 %v243
        %397 = vmatprep.subr.mxu0 %v240
        %398 = vmatpush1.msra.mxu0 %v239
        %399 = vmatprep.subr.mxu0 %v364
        %400 = vmatpush2.msra.mxu0 %v363
        %401 = vmatprep.subr.mxu0 %v360
        %402 = vmatpush2.msra.mxu0 %v359
        %403 = vmatprep.subr.mxu0 %v356
        %404 = vmatpush2.msra.mxu0 %v355
        %405 = vmatprep.subr.mxu0 %v352
        %406 = vmatpush2.msra.mxu0 %v351
        %407 = vmatprep.subr.mxu0 %v348
        %408 = vmatpush2.msra.mxu0 %v347
        %409 = vmatprep.subr.mxu0 %v344
        %410 = vmatpush2.msra.mxu0 %v343
        %411 = vmatprep.subr.mxu0 %v340
        %412 = vmatpush2.msra.mxu0 %v339
        %413 = vmatprep.subr.mxu0 %v336
        %414 = vmatpush2.msra.mxu0 %v335
        %415 = vmatprep.subr.mxu0 %v332
        %416 = vmatpush2.msra.mxu0 %v331
        %417 = vmatprep.subr.mxu0 %v328
        %418 = vmatpush2.msra.mxu0 %v327
        %419 = vmatprep.subr.mxu0 %v324
        %420 = vmatpush2.msra.mxu0 %v323
        %421 = vmatprep.subr.mxu0 %v320
        %422 = vmatpush2.msra.mxu0 %v319
        %423 = vmatprep.subr.mxu0 %v316
        %424 = vmatpush2.msra.mxu0 %v315
        %425 = vmatprep.subr.mxu0 %v312
        %426 = vmatpush2.msra.mxu0 %v311
        %427 = vmatprep.subr.mxu0 %v308
        %428 = vmatpush2.msra.mxu0 %v307
        %429 = vmatprep.subr.mxu0 %v304
        %430 = vmatpush2.msra.mxu0 %v303
        %431 = vmatprep.mubr.f32.mxu0 %v237
        %432 = vmatmul.mubr.f32.gmra.mxu0 %v233
        %v433 = vpop.f32.mrf.mxu0
        %v434 = vadd.f32 0.0, %v433
        %v435 = vpop.f32.mrf.mxu0
        %v436 = vadd.f32 0.0, %v435
        %437 = vmatprep.mubr.f32.mxu0 %v238
        %438 = vmatmul.mubr.f32.gmra.mxu0 %v234
        %v439 = vpop.f32.mrf.mxu0
        %v440 = vadd.f32 0.0, %v439
        %v441 = vpop.f32.mrf.mxu0
        %v442 = vadd.f32 0.0, %v441
        %443 = vdwg.mxu0
        %444 = vmatprep.subr.mxu0 %v302
        %445 = vmatpush1.msra.mxu0 %v301
        %446 = vmatprep.subr.mxu0 %v298
        %447 = vmatpush1.msra.mxu0 %v297
        %448 = vmatprep.subr.mxu0 %v294
        %449 = vmatpush1.msra.mxu0 %v293
        %450 = vmatprep.subr.mxu0 %v290
        %451 = vmatpush1.msra.mxu0 %v289
        %452 = vmatprep.subr.mxu0 %v286
        %453 = vmatpush1.msra.mxu0 %v285
        %454 = vmatprep.subr.mxu0 %v282
        %455 = vmatpush1.msra.mxu0 %v281
        %456 = vmatprep.subr.mxu0 %v278
        %457 = vmatpush1.msra.mxu0 %v277
        %458 = vmatprep.subr.mxu0 %v274
        %459 = vmatpush1.msra.mxu0 %v273
        %460 = vmatprep.subr.mxu0 %v270
        %461 = vmatpush1.msra.mxu0 %v269
        %462 = vmatprep.subr.mxu0 %v266
        %463 = vmatpush1.msra.mxu0 %v265
        %464 = vmatprep.subr.mxu0 %v262
        %465 = vmatpush1.msra.mxu0 %v261
        %466 = vmatprep.subr.mxu0 %v258
        %467 = vmatpush1.msra.mxu0 %v257
        %468 = vmatprep.subr.mxu0 %v254
        %469 = vmatpush1.msra.mxu0 %v253
        %470 = vmatprep.subr.mxu0 %v250
        %471 = vmatpush1.msra.mxu0 %v249
        %472 = vmatprep.subr.mxu0 %v246
        %473 = vmatpush1.msra.mxu0 %v245
        %474 = vmatprep.subr.mxu0 %v242
        %475 = vmatpush1.msra.mxu0 %v241
        %476 = vmatprep.subr.mxu0 %v366
        %477 = vmatpush2.msra.mxu0 %v365
        %478 = vmatprep.subr.mxu0 %v362
        %479 = vmatpush2.msra.mxu0 %v361
        %480 = vmatprep.subr.mxu0 %v358
        %481 = vmatpush2.msra.mxu0 %v357
        %482 = vmatprep.subr.mxu0 %v354
        %483 = vmatpush2.msra.mxu0 %v353
        %484 = vmatprep.subr.mxu0 %v350
        %485 = vmatpush2.msra.mxu0 %v349
        %486 = vmatprep.subr.mxu0 %v346
        %487 = vmatpush2.msra.mxu0 %v345
        %488 = vmatprep.subr.mxu0 %v342
        %489 = vmatpush2.msra.mxu0 %v341
        %490 = vmatprep.subr.mxu0 %v338
        %491 = vmatpush2.msra.mxu0 %v337
        %492 = vmatprep.subr.mxu0 %v334
        %493 = vmatpush2.msra.mxu0 %v333
        %494 = vmatprep.subr.mxu0 %v330
        %495 = vmatpush2.msra.mxu0 %v329
        %496 = vmatprep.subr.mxu0 %v326
        %497 = vmatpush2.msra.mxu0 %v325
        %498 = vmatprep.subr.mxu0 %v322
        %499 = vmatpush2.msra.mxu0 %v321
        %500 = vmatprep.subr.mxu0 %v318
        %501 = vmatpush2.msra.mxu0 %v317
        %502 = vmatprep.subr.mxu0 %v314
        %503 = vmatpush2.msra.mxu0 %v313
        %504 = vmatprep.subr.mxu0 %v310
        %505 = vmatpush2.msra.mxu0 %v309
        %506 = vmatprep.subr.mxu0 %v306
        %507 = vmatpush2.msra.mxu0 %v305
        %508 = vmatprep.mubr.f32.mxu0 %v237
        %509 = vmatmul.mubr.f32.gmra.mxu0 %v233
        %v510 = vpop.f32.mrf.mxu0
        %v511 = vadd.f32 0.0, %v510
        %v512 = vpop.f32.mrf.mxu0
        %v513 = vadd.f32 0.0, %v512
        %514 = vmatprep.mubr.f32.mxu0 %v238
        %515 = vmatmul.mubr.f32.gmra.mxu0 %v234
        %v516 = vpop.f32.mrf.mxu0
        %v517 = vadd.f32 0.0, %v516
        %v518 = vpop.f32.mrf.mxu0
        %v519 = vadd.f32 0.0, %v518
        %520 = vdwg.mxu0
        %v521 = vld [vmem:[%s2] sm:$0xff]
        %v522 = vld [vmem:[%s2 + $0x8] sm:$0xff]
        %v523 = vld [vmem:[%s2 + $0x10] sm:$0xff]
        %v524 = vld [vmem:[%s2 + $0x18] sm:$0xff]
        %vm525 = vcmask 261120
        %v527 = vsel %vm525, %v521, 0
        %v530 = vsel %vm525, %v522, 0
        %v533 = vsel %vm525, %v523, 0
        %v536 = vsel %vm525, %v524, 0
        %538 = vmatprep.subr.mxu0 0.0
        %539 = vmatpush1.msra.mxu0 0.0
        %540 = vmatprep.subr.mxu0 0.0
        %541 = vmatpush1.msra.mxu0 0.0
        %542 = vmatprep.subr.mxu0 0.0
        %543 = vmatpush1.msra.mxu0 0.0
        %544 = vmatprep.subr.mxu0 0.0
        %545 = vmatpush1.msra.mxu0 0.0
        %546 = vmatprep.subr.mxu0 0.0
        %547 = vmatpush1.msra.mxu0 0.0
        %548 = vmatprep.subr.mxu0 0.0
        %549 = vmatpush1.msra.mxu0 0.0
        %550 = vmatprep.subr.mxu0 0.0
        %551 = vmatpush1.msra.mxu0 0.0
        %552 = vmatprep.subr.mxu0 0.0
        %553 = vmatpush1.msra.mxu0 0.0
        %554 = vmatprep.subr.mxu0 0.0
        %555 = vmatpush1.msra.mxu0 0.0
        %556 = vmatprep.subr.mxu0 0.0
        %557 = vmatpush1.msra.mxu0 0.0
        %558 = vmatprep.subr.mxu0 0.0
        %559 = vmatpush1.msra.mxu0 0.0
        %560 = vmatprep.subr.mxu0 0.0
        %561 = vmatpush1.msra.mxu0 0.0
        %562 = vmatprep.subr.mxu0 %v519
        %563 = vmatpush1.msra.mxu0 %v517
        %564 = vmatprep.subr.mxu0 %v513
        %565 = vmatpush1.msra.mxu0 %v511
        %566 = vmatprep.subr.mxu0 %v442
        %567 = vmatpush1.msra.mxu0 %v440
        %568 = vmatprep.subr.mxu0 %v436
        %569 = vmatpush1.msra.mxu0 %v434
        %570 = vmatprep.subr.mxu0 0.0
        %571 = vmatpush2.msra.mxu0 0.0
        %572 = vmatprep.subr.mxu0 0.0
        %573 = vmatpush2.msra.mxu0 0.0
        %574 = vmatprep.subr.mxu0 0.0
        %575 = vmatpush2.msra.mxu0 0.0
        %576 = vmatprep.subr.mxu0 0.0
        %577 = vmatpush2.msra.mxu0 0.0
        %578 = vmatprep.subr.mxu0 0.0
        %579 = vmatpush2.msra.mxu0 0.0
        %580 = vmatprep.subr.mxu0 0.0
        %581 = vmatpush2.msra.mxu0 0.0
        %582 = vmatprep.subr.mxu0 0.0
        %583 = vmatpush2.msra.mxu0 0.0
        %584 = vmatprep.subr.mxu0 0.0
        %585 = vmatpush2.msra.mxu0 0.0
        %586 = vmatprep.subr.mxu0 0.0
        %587 = vmatpush2.msra.mxu0 0.0
        %588 = vmatprep.subr.mxu0 0.0
        %589 = vmatpush2.msra.mxu0 0.0
        %590 = vmatprep.subr.mxu0 0.0
        %591 = vmatpush2.msra.mxu0 0.0
        %592 = vmatprep.subr.mxu0 0.0
        %593 = vmatpush2.msra.mxu0 0.0
        %594 = vmatprep.subr.mxu0 0.0
        %595 = vmatpush2.msra.mxu0 0.0
        %596 = vmatprep.subr.mxu0 0.0
        %597 = vmatpush2.msra.mxu0 0.0
        %598 = vmatprep.subr.mxu0 0.0
        %599 = vmatpush2.msra.mxu0 0.0
        %600 = vmatprep.subr.mxu0 0.0
        %601 = vmatpush2.msra.mxu0 0.0
        %602 = vmatprep.mubr.f32.mxu0 0.0
        %603 = vmatmul.mubr.f32.gmra.mxu0 %v527
        %v604 = vpop.f32.mrf.mxu0
        %v605 = vadd.f32 0.0, %v604
        %v606 = vpop.f32.mrf.mxu0
        %v607 = vadd.f32 0.0, %v606
        %608 = vmatprep.mubr.f32.mxu0 0.0
        %609 = vmatmul.mubr.f32.gmra.mxu0 %v530
        %v610 = vpop.f32.mrf.mxu0
        %v611 = vadd.f32 0.0, %v610
        %v612 = vpop.f32.mrf.mxu0
        %v613 = vadd.f32 0.0, %v612
        %614 = vmatprep.mubr.f32.mxu0 0.0
        %615 = vmatmul.mubr.f32.gmra.mxu0 %v533
        %v616 = vpop.f32.mrf.mxu0
        %v617 = vadd.f32 0.0, %v616
        %v618 = vpop.f32.mrf.mxu0
        %v619 = vadd.f32 0.0, %v618
        %620 = vmatprep.mubr.f32.mxu0 0.0
        %621 = vmatmul.mubr.f32.gmra.mxu0 %v536
        %v622 = vpop.f32.mrf.mxu0
        %v623 = vadd.f32 0.0, %v622
        %v624 = vpop.f32.mrf.mxu0
        %v625 = vadd.f32 0.0, %v624
        %626 = vdwg.mxu0
        %627 = vst [vmem:[%s232] sm:$0xff] %v605
        %628 = vst [vmem:[%s232 + $0x8] sm:$0xff] %v607
        %629 = vst [vmem:[%s232 + $0x10] sm:$0xff] %v611
        %630 = vst [vmem:[%s232 + $0x18] sm:$0xff] %v613
        %631 = vst [vmem:[%s232 + $0x20] sm:$0xff] %v617
        %632 = vst [vmem:[%s232 + $0x28] sm:$0xff] %v619
        %633 = vst [vmem:[%s232 + $0x30] sm:$0xff] %v623
        %634 = vst [vmem:[%s232 + $0x38] sm:$0xff] %v625
        %p635 = scmp.lt.s32.totalorder %s16, 1
        %s636 = scalar_select %p635, %s16, 1
        %s637 = smul.addr %s636, 8
        %s638 = smul.addr %s637, 8
        %s639 = scalar_lea.vmem %s4, %s638
        // Predicated region
        $region41: #{radar_fft3d.1} parent=35 // pred_check
          %p640 = pneg %p128
        $region42: #{radar_fft3d.1} parent=35 // pred_check_branch
          %642 = sbr.rel (%p640) target = $region44
        $region43: #{radar_fft3d.1} parent=35 // pred_region
          _
        $region44: #{radar_fft3d.1} parent=35 // pred_fallthru
          _
      $region36: #{radar_fft3d.1} parent=5 // pred_fallthru
        _
      %p643 = scmp.le.s32.totalorder 2, %s11
      // Predicated region
      $region45: #{radar_fft3d.1} parent=5 // pred_check
        %p644 = pneg %p643
      $region46: #{radar_fft3d.1} parent=5 // pred_check_branch
        %646 = sbr.rel (%p644) target = $region48
      $region47: #{radar_fft3d.1} parent=5 // pred_region
        %s647 = ssub.s32 %s11, 2
        // Predicated region
        $region49: #{radar_fft3d.1} parent=47 // pred_check
          %p648 = pneg %p134
        $region50: #{radar_fft3d.1} parent=47 // pred_check_branch
          %650 = sbr.rel (%p648) target = $region52
        $region51: #{radar_fft3d.1} parent=47 // pred_region
          %p651 = scmp.lt.s32.totalorder %s17, 1
          %s652 = scalar_select %p651, %s17, 1
          %s653 = smul.addr %s652, 8
          %s654 = smul.addr %s653, 8
          %s655 = scalar_lea.vmem %s4, %s654
        $region52: #{radar_fft3d.1} parent=47 // pred_fallthru
          _
      $region48: #{radar_fft3d.1} parent=5 // pred_fallthru
        _
    $region6: #{radar_fft3d.1} parent=1 // loop_footer
      %s15 = sadd.s32 1, %s11
    $region7: #{radar_fft3d.1} parent=1 // loop_footer_branch
      %10 = sbr.rel target = $region3
    $region8: #{radar_fft3d.1} parent=1 // loop_exit
      _
    %656 = vsyncpa [#allocation3], 1
    %s657 = scalar_lea.sflag [#allocation3], 1
    %658 = vsyncpa %s657, 1

</llo_original>
